<compile_context>
chip_gen: v6e
topology: v6e:2x2x1
jax: 0.10.0
libtpu: 0.0.40
codegen_flags: <defaults>
</compile_context>

<pallas_src>
import functools
import math

import jax
import jax.numpy as jnp
from jax import lax
from jax.experimental import pallas as pl
from jax.experimental.pallas import tpu as pltpu

COS_EPS = 1e-8      # F.cosine_similarity eps (clamp applied to each norm)
EPS = 1e-8          # self.eps in the module
_NEG_INIT = -1e30   # "minus infinity" for the online row max (finite: exp underflows to 0)


def _round_up(x, m):
    return ((x + m - 1) // m) * m


def _choose_tiling(b, d):
    """Pick (padded batch, row tile, col tile, vmem limit) per TPU generation."""
    try:
        vmem_cap = pltpu.get_tpu_info().vmem_capacity_bytes
    except Exception:
        vmem_cap = 64 * 1024 * 1024            # conservative (v7x per-core VMEM)
    big_vmem = vmem_cap >= 100 * 1024 * 1024   # v5e/v6e: 128 MiB, v7x: 64 MiB
    vmem_limit = (64 if big_vmem else 48) * 1024 * 1024
    budget = vmem_limit - 12 * 1024 * 1024

    def step_bytes(t_r, t_c):
        reps_bytes = (t_r + t_c) * d * 4 * 2      # two reps operands, double-buffered
        stats_bytes = 4 * t_r * 128 * 4 * 2       # 4 lane-padded (t_r,1) outs, 2 bufs
        temp_bytes = 4 * t_r * t_c * 4            # f32 elementwise temporaries
        return reps_bytes + stats_bytes + temp_bytes

    if b < 256:
        bp = _round_up(b, 8)
        tn = bp                                   # one full (lane-dense) column block
        # >= 2 row tiles when possible so both v7x TensorCores get work.
        tm = bp // 2 if (bp >= 16 and (bp // 2) % 8 == 0) else bp
        return bp, tm, tn, vmem_limit

    cap_t = 512 if big_vmem else 256              # 512^2 tiles on v6e/v5e, 256 on v7x
    t = min(cap_t, _round_up(b, 128))
    while t > 128 and step_bytes(t, t) > budget:
        t -= 128
    bp = _round_up(b, t)
    tm = t if bp // t >= 2 else max(8, t // 2)    # keep >= 2 row tiles (v7x megacore)
    return bp, tm, t, vmem_limit


def _stats_kernel(reps_i_ref, reps_j_ref, inv_i_ref, inv_j_ref,
                  lab_i_ref, lab_j_ref,
                  rowmax_ref, possum_ref, poscnt_ref, negsum_ref,
                  *, bias, n_valid, padded):
    """Per (row-tile, col-tile) grid step: accumulate per-row statistics.

    Outputs (all (tm, 1) accumulators, revisited across the column axis j):
      rowmax : online max of the (diag-zeroed) score row
      possum : sum of raw scores over positive (same-label, off-diag) pairs
      poscnt : count of positive pairs
      negsum : sum of exp(score - rowmax) over negative (different-label) pairs
    """
    i = pl.program_id(0)
    j = pl.program_id(1)
    tm = reps_i_ref.shape[0]
    tn = reps_j_ref.shape[0]

    @pl.when(j == 0)
    def _init():
        rowmax_ref[...] = jnp.full(rowmax_ref.shape, _NEG_INIT, rowmax_ref.dtype)
        possum_ref[...] = jnp.zeros_like(possum_ref)
        poscnt_ref[...] = jnp.zeros_like(poscnt_ref)
        negsum_ref[...] = jnp.zeros_like(negsum_ref)

    # Gram tile on the MXU, contracting D against D (no transpose).  Operands
    # may be bf16 (wrapper cast) for MXU-native throughput; accumulate in f32.
    g = lax.dot_general(reps_i_ref[...], reps_j_ref[...],
                        dimension_numbers=(((1,), (1,)), ((), ())),
                        preferred_element_type=jnp.float32)        # (tm, tn)

    # scores = ((1+cos)/2 + eps)/T, with cos = g * inv_i * inv_j.
    # inv_i already carries the 1/(2T) factor; bias = (0.5 + eps)/T.
    scores = (g * inv_i_ref[...]) * inv_j_ref[...] + bias          # (tm, tn)

    pos = lab_i_ref[...] == lab_j_ref[...]                         # (tm, tn) bool

    if padded:  # static: only emitted when B was padded to a tile multiple
        cols = lax.broadcasted_iota(jnp.int32, (tm, tn), 1) + j * tn
        keep = cols < n_valid
        scores = jnp.where(keep, scores, 0.0)
    else:
        keep = None

    def _mask(m):
        return m if keep is None else jnp.logical_and(m, keep)

    def _accum(s, pmask, nmask):
        # Positive-pair linear sums (global-max shift applied in the finalize).
        possum_ref[...] += jnp.sum(jnp.where(pmask, s, 0.0), axis=-1, keepdims=True)
        poscnt_ref[...] += jnp.sum(jnp.where(pmask, 1.0, 0.0), axis=-1, keepdims=True)
        # Online per-row max + rescaled running negative-exp sum.
        m_prev = rowmax_ref[...]
        m_new = jnp.maximum(m_prev, jnp.max(s, axis=-1, keepdims=True))
        e = jnp.exp(s - m_new)
        negsum_ref[...] = (negsum_ref[...] * jnp.exp(m_prev - m_new) +
                           jnp.sum(jnp.where(nmask, e, 0.0), axis=-1, keepdims=True))
        rowmax_ref[...] = m_new

    row0 = i * tm
    col0 = j * tn
    has_diag = jnp.logical_and(row0 < col0 + tn, col0 < row0 + tm)

    @pl.when(jnp.logical_not(has_diag))
    def _off_diag_tile():
        # No diagonal entries in this tile: skip all iota/compare/select work.
        _accum(scores, _mask(pos), _mask(jnp.logical_not(pos)))

    @pl.when(has_diag)
    def _diag_tile():
        rows_g = lax.broadcasted_iota(jnp.int32, (tm, tn), 0) + row0
        cols_g = lax.broadcasted_iota(jnp.int32, (tm, tn), 1) + col0
        is_diag = rows_g == cols_g
        s = jnp.where(is_diag, 0.0, scores)            # reference zeroes the diagonal
        pm = jnp.logical_and(pos, jnp.logical_not(is_diag))
        _accum(s, _mask(pm), _mask(jnp.logical_not(pos)))   # diag is pos -> auto-excluded from negs


def _finalize_kernel(stats_ref, out_ref, *, n_valid, padded):
    """Apply the global max analytically and emit the scalar loss (SMEM)."""
    st = stats_ref[...]                 # (4, Bp) lane-dense
    rowmax = st[0:1, :]
    possum = st[1:2, :]
    poscnt = st[2:3, :]
    negsum = st[3:4, :]

    if padded:
        bp = st.shape[1]
        valid = lax.broadcasted_iota(jnp.int32, (1, bp), 1) < n_valid
        m = jnp.max(jnp.where(valid, rowmax, _NEG_INIT))
    else:
        valid = None
        m = jnp.max(rowmax)

    pos_scores = (possum - m * poscnt) / (poscnt + EPS)
    neg_sum = jnp.exp(rowmax - m) * negsum
    loss = -pos_scores + jnp.log(neg_sum + EPS)        # (1, Bp)
    lmask = loss > 0.0
    if valid is not None:
        lmask = jnp.logical_and(lmask, valid)
    total = jnp.sum(jnp.where(lmask, loss, 0.0))
    cnt = jnp.sum(jnp.where(lmask, 1.0, 0.0))
    out_ref[0, 0] = total / (cnt + EPS)


def sup_proto_con_loss(reps, labels, temperature, *,
                       use_bf16_gram=False, tile_override=None):
    """reps: (B, D) float32, labels: (B,) int — returns scalar float32 loss."""
    assert labels.ndim == 1, "labels must be 1-D"
    B, D = reps.shape
    reps = reps.astype(jnp.float32)
    labels = labels.astype(jnp.int32)

    Bp, tm, tn, vmem_limit = _choose_tiling(B, D)
    if tile_override is not None:
        tm, tn = tile_override
        Bp = _round_up(B, (tm * tn) // math.gcd(tm, tn))

    padded = Bp != B
    if padded:
        reps_p = jnp.pad(reps, ((0, Bp - B), (0, 0)))
        labels_p = jnp.pad(labels, (0, Bp - B), constant_values=-1)
    else:
        reps_p, labels_p = reps, labels

    inv2t = 0.5 / float(temperature)
    bias = (0.5 + EPS) / float(temperature)

    # Per-row inverse norms, computed once (review item 1).  Clamp each norm at
    # the cosine eps; matches the product clamp except for near-zero vectors.
    sq = jnp.sum(reps_p * reps_p, axis=-1, keepdims=True)                # (Bp, 1)
    inv_n = lax.rsqrt(jnp.maximum(sq, COS_EPS * COS_EPS))
    inv_i_full = (inv_n * inv2t).astype(jnp.float32)                     # carries 1/(2T)
    inv_j_full = inv_n.reshape(1, Bp).astype(jnp.float32)

    lab_i_full = labels_p.reshape(Bp, 1)
    lab_j_full = labels_p.reshape(1, Bp)

    reps_in = reps_p.astype(jnp.bfloat16) if use_bf16_gram else reps_p

    grid = (Bp // tm, Bp // tn)
    kernel = functools.partial(_stats_kernel, bias=bias, n_valid=B, padded=padded)
    stat_shape = jax.ShapeDtypeStruct((Bp, 1), jnp.float32)
    stat_spec = pl.BlockSpec((tm, 1), lambda i, j: (i, 0))

    rowmax, possum, poscnt, negsum = pl.pallas_call(
        kernel,
        grid=grid,
        in_specs=[
            pl.BlockSpec((tm, D), lambda i, j: (i, 0)),   # row-block reps
            pl.BlockSpec((tn, D), lambda i, j: (j, 0)),   # col-block reps
            pl.BlockSpec((tm, 1), lambda i, j: (i, 0)),   # row inv-norm (pre-scaled)
            pl.BlockSpec((1, tn), lambda i, j: (0, j)),   # col inv-norm
            pl.BlockSpec((tm, 1), lambda i, j: (i, 0)),   # row labels (int32)
            pl.BlockSpec((1, tn), lambda i, j: (0, j)),   # col labels (int32)
        ],
        out_specs=[stat_spec, stat_spec, stat_spec, stat_spec],
        out_shape=[stat_shape, stat_shape, stat_shape, stat_shape],
        compiler_params=pltpu.CompilerParams(
            dimension_semantics=("parallel", "arbitrary"),
            vmem_limit_bytes=vmem_limit),
    )(reps_in, reps_in, inv_i_full, inv_j_full, lab_i_full, lab_j_full)

    # Pack the four (Bp,1) stats lane-dense -> (4, Bp) so the finalize kernel
    # does not pull four 128-lane-padded columns into VMEM (review item 8).
    stats = jnp.concatenate([rowmax.T, possum.T, poscnt.T, negsum.T], axis=0)

    out = pl.pallas_call(
        functools.partial(_finalize_kernel, n_valid=B, padded=padded),
        out_shape=jax.ShapeDtypeStruct((1, 1), jnp.float32),
        in_specs=[pl.BlockSpec((4, Bp), lambda: (0, 0))],
        out_specs=pl.BlockSpec(memory_space=pltpu.MemorySpace.SMEM),
    )(stats)
    return out[0, 0]


def sup_proto_con_loss_ref(reps, labels, temperature):
    """Pure-JAX reference mirroring the PyTorch forward exactly."""
    B = reps.shape[0]
    eye = jnp.eye(B, dtype=jnp.float32)
    off_diag = 1.0 - eye
    pos_mask = (labels[None, :] == labels[:, None]).astype(jnp.float32)

    norms = jnp.sqrt(jnp.sum(reps * reps, axis=-1))
    denom = jnp.maximum(norms[:, None] * norms[None, :], COS_EPS)
    cos = (reps @ reps.T) / denom
    scores = (1.0 + cos) / 2.0 + EPS
    scores = scores * off_diag
    scores = scores / temperature
    scores = scores - jnp.max(scores)

    pm = pos_mask * off_diag
    pos_scores = jnp.sum(scores * pm, axis=-1) / (jnp.sum(pm, axis=-1) + EPS)
    neg_sum = jnp.sum(jnp.exp(scores) * (1.0 - pos_mask), axis=-1)
    loss = -pos_scores + jnp.log(neg_sum + EPS)
    lmask = (loss > 0).astype(jnp.float32)
    return jnp.sum(loss * lmask) / (jnp.sum(lmask) + EPS)


if __name__ == "__main__":
    key = jax.random.PRNGKey(0)

    # --- test 1: small batch, exact f32 path (single tile) -------------------
    k1, k2, key = jax.random.split(key, 3)
    B, D, temp = 8, 32, 0.5
    reps = jax.random.normal(k1, (B, D), dtype=jnp.float32)
    labels = jax.random.randint(k2, (B,), 0, 3, dtype=jnp.int32)  # < D, >= 0
    out = jax.block_until_ready(sup_proto_con_loss(reps, labels, temp))
    ref = jax.block_until_ready(sup_proto_con_loss_ref(reps, labels, temp))
    assert jnp.allclose(out, ref, rtol=1e-5, atol=1e-5), ("test1", out, ref)

    # --- test 2: awkward batch -> internal padding + 2 row tiles --------------
    k1, k2, key = jax.random.split(key, 3)
    B, D, temp = 12, 32, 0.7
    reps = jax.random.normal(k1, (B, D), dtype=jnp.float32)
    labels = jax.random.randint(k2, (B,), 0, 5, dtype=jnp.int32)
    out = jax.block_until_ready(sup_proto_con_loss(reps, labels, temp))
    ref = jax.block_until_ready(sup_proto_con_loss_ref(reps, labels, temp))
    assert jnp.allclose(out, ref, rtol=1e-5, atol=1e-5), ("test2", out, ref)

    # --- test 3: multi-tile grid (off-diagonal tiles exercised) ---------------
    k1, k2, key = jax.random.split(key, 3)
    B, D, temp = 256, 64, 0.5
    reps = jax.random.normal(k1, (B, D), dtype=jnp.float32)
    labels = jax.random.randint(k2, (B,), 0, 8, dtype=jnp.int32)
    ref = jax.block_until_ready(sup_proto_con_loss_ref(reps, labels, temp))
    out = jax.block_until_ready(
        sup_proto_con_loss(reps, labels, temp, tile_override=(128, 128)))
    assert jnp.allclose(out, ref, rtol=1e-4, atol=1e-4), ("test3", out, ref)

    # --- test 4: bf16 Gram matmul (MXU-native), looser tolerance --------------
    out_bf16 = jax.block_until_ready(
        sup_proto_con_loss(reps, labels, temp, use_bf16_gram=True))
    assert jnp.allclose(out_bf16, ref, rtol=5e-2, atol=5e-2), ("test4", out_bf16, ref)

    print("KERNEL_OK")
</pallas_src>

<mosaic_0001>
module attributes {stable_mosaic.version = 11 : i64} {
  func.func @_stats_kernel(%arg0: i32, %arg1: i32, %arg2: memref<8x32xf32, #tpu.memory_space<vmem>>, %arg3: memref<8x32xf32, #tpu.memory_space<vmem>>, %arg4: memref<8x1xf32, #tpu.memory_space<vmem>>, %arg5: memref<1x8xf32, #tpu.memory_space<vmem>>, %arg6: memref<8x1xi32, #tpu.memory_space<vmem>>, %arg7: memref<1x8xi32, #tpu.memory_space<vmem>>, %arg8: memref<8x1xf32, #tpu.memory_space<vmem>>, %arg9: memref<8x1xf32, #tpu.memory_space<vmem>>, %arg10: memref<8x1xf32, #tpu.memory_space<vmem>>, %arg11: memref<8x1xf32, #tpu.memory_space<vmem>>) attributes {dimension_semantics = [#tpu.dimension_semantics<parallel>, #tpu.dimension_semantics<arbitrary>], iteration_bounds = array<i64: 1, 1>, scalar_prefetch = 0 : i64, scratch_operands = 0 : i64, tpu.core_type = #tpu.core_type<tc>, window_params = [{transform_indices = @transform_0, window_bounds = array<i64: 8, 32>}, {transform_indices = @transform_1, window_bounds = array<i64: 8, 32>}, {transform_indices = @transform_2, window_bounds = array<i64: 8, 1>}, {transform_indices = @transform_3, window_bounds = array<i64: 1, 8>}, {transform_indices = @transform_4, window_bounds = array<i64: 8, 1>}, {transform_indices = @transform_5, window_bounds = array<i64: 1, 8>}, {transform_indices = @transform_6, window_bounds = array<i64: 8, 1>}, {transform_indices = @transform_7, window_bounds = array<i64: 8, 1>}, {transform_indices = @transform_8, window_bounds = array<i64: 8, 1>}, {transform_indices = @transform_9, window_bounds = array<i64: 8, 1>}]} {
    %c0_i32 = arith.constant 0 : i32
    %0 = arith.cmpi eq, %arg1, %c0_i32 : i32
    %1 = arith.extui %0 : i1 to i32
    %c0_i32_0 = arith.constant 0 : i32
    %2 = arith.cmpi ne, %1, %c0_i32_0 : i32
    scf.if %2 {
      %cst_18 = arith.constant -1.000000e+30 : f32
      %31 = vector.broadcast %cst_18 : f32 to vector<8x1xf32>
      %c0_19 = arith.constant 0 : index
      %c0_20 = arith.constant 0 : index
      %32 = vector.load %arg8[%c0_19, %c0_20] : memref<8x1xf32, #tpu.memory_space<vmem>>, vector<8x1xf32>
      tpu.vector_store %arg8[%c0_19, %c0_20], %31 {strides = array<i32>} : memref<8x1xf32, #tpu.memory_space<vmem>>, vector<8x1xf32>,
      %cst_21 = arith.constant 0.000000e+00 : f32
      %33 = vector.broadcast %cst_21 : f32 to vector<8x1xf32>
      %c0_22 = arith.constant 0 : index
      %c0_23 = arith.constant 0 : index
      %34 = vector.load %arg9[%c0_22, %c0_23] : memref<8x1xf32, #tpu.memory_space<vmem>>, vector<8x1xf32>
      tpu.vector_store %arg9[%c0_22, %c0_23], %33 {strides = array<i32>} : memref<8x1xf32, #tpu.memory_space<vmem>>, vector<8x1xf32>,
      %cst_24 = arith.constant 0.000000e+00 : f32
      %35 = vector.broadcast %cst_24 : f32 to vector<8x1xf32>
      %c0_25 = arith.constant 0 : index
      %c0_26 = arith.constant 0 : index
      %36 = vector.load %arg10[%c0_25, %c0_26] : memref<8x1xf32, #tpu.memory_space<vmem>>, vector<8x1xf32>
      tpu.vector_store %arg10[%c0_25, %c0_26], %35 {strides = array<i32>} : memref<8x1xf32, #tpu.memory_space<vmem>>, vector<8x1xf32>,
      %cst_27 = arith.constant 0.000000e+00 : f32
      %37 = vector.broadcast %cst_27 : f32 to vector<8x1xf32>
      %c0_28 = arith.constant 0 : index
      %c0_29 = arith.constant 0 : index
      %38 = vector.load %arg11[%c0_28, %c0_29] : memref<8x1xf32, #tpu.memory_space<vmem>>, vector<8x1xf32>
      tpu.vector_store %arg11[%c0_28, %c0_29], %37 {strides = array<i32>} : memref<8x1xf32, #tpu.memory_space<vmem>>, vector<8x1xf32>,
    } else {
    }
    %c0 = arith.constant 0 : index
    %c0_1 = arith.constant 0 : index
    %3 = vector.load %arg2[%c0, %c0_1] : memref<8x32xf32, #tpu.memory_space<vmem>>, vector<8x32xf32>
    %c0_2 = arith.constant 0 : index
    %c0_3 = arith.constant 0 : index
    %4 = vector.load %arg3[%c0_2, %c0_3] : memref<8x32xf32, #tpu.memory_space<vmem>>, vector<8x32xf32>
    %cst = arith.constant dense<0.000000e+00> : vector<8x8xf32>
    %5 = tpu.matmul %3, %4, %cst {dimension_numbers = #tpu.dot_dimension_numbers<[1], [1], [0], [0], [0, 0, 1, 0], [], []>} : vector<8x32xf32>, vector<8x32xf32>, vector<8x8xf32> -> vector<8x8xf32>
    %c0_4 = arith.constant 0 : index
    %c0_5 = arith.constant 0 : index
    %6 = vector.load %arg4[%c0_4, %c0_5] : memref<8x1xf32, #tpu.memory_space<vmem>>, vector<8x1xf32>
    %7 = vector.broadcast %6 : vector<8x1xf32> to vector<8x8xf32>
    %8 = arith.mulf %5, %7 : vector<8x8xf32>
    %c0_6 = arith.constant 0 : index
    %c0_7 = arith.constant 0 : index
    %9 = vector.load %arg5[%c0_6, %c0_7] : memref<1x8xf32, #tpu.memory_space<vmem>>, vector<1x8xf32>
    %10 = vector.broadcast %9 : vector<1x8xf32> to vector<8x8xf32>
    %11 = arith.mulf %8, %10 : vector<8x8xf32>
    %cst_8 = arith.constant 1.000000e+00 : f32
    %12 = vector.broadcast %cst_8 : f32 to vector<8x8xf32>
    %13 = arith.addf %11, %12 : vector<8x8xf32>
    %c0_9 = arith.constant 0 : index
    %c0_10 = arith.constant 0 : index
    %14 = vector.load %arg6[%c0_9, %c0_10] : memref<8x1xi32, #tpu.memory_space<vmem>>, vector<8x1xi32>
    %c0_11 = arith.constant 0 : index
    %c0_12 = arith.constant 0 : index
    %15 = vector.load %arg7[%c0_11, %c0_12] : memref<1x8xi32, #tpu.memory_space<vmem>>, vector<1x8xi32>
    %16 = vector.broadcast %14 : vector<8x1xi32> to vector<8x8xi32>
    %17 = vector.broadcast %15 : vector<1x8xi32> to vector<8x8xi32>
    %18 = arith.cmpi eq, %16, %17 : vector<8x8xi32>
    %c8_i32 = arith.constant 8 : i32
    %19 = arith.muli %arg0, %c8_i32 : i32
    %c8_i32_13 = arith.constant 8 : i32
    %20 = arith.muli %arg1, %c8_i32_13 : i32
    %c8_i32_14 = arith.constant 8 : i32
    %21 = arith.addi %20, %c8_i32_14 : i32
    %22 = arith.cmpi slt, %19, %21 : i32
    %c8_i32_15 = arith.constant 8 : i32
    %23 = arith.addi %19, %c8_i32_15 : i32
    %24 = arith.cmpi slt, %20, %23 : i32
    %25 = arith.andi %22, %24 : i1
    %true = arith.constant true
    %26 = arith.xori %25, %true : i1
    %27 = arith.extui %26 : i1 to i32
    %c0_i32_16 = arith.constant 0 : i32
    %28 = arith.cmpi ne, %27, %c0_i32_16 : i32
    scf.if %28 {
      %cst_18 = arith.constant dense<true> : vector<8x8xi1>
      %31 = arith.xori %18, %cst_18 : vector<8x8xi1>
      %c0_19 = arith.constant 0 : index
      %c0_20 = arith.constant 0 : index
      %32 = vector.load %arg9[%c0_19, %c0_20] : memref<8x1xf32, #tpu.memory_space<vmem>>, vector<8x1xf32>
      %cst_21 = arith.constant 0.000000e+00 : f32
      %33 = vector.broadcast %cst_21 : f32 to vector<8x8xf32>
      %34 = arith.select %18, %13, %33 : vector<8x8xi1>, vector<8x8xf32>
      %cst_22 = arith.constant dense<0.000000e+00> : vector<8xf32>
      %35 = vector.multi_reduction <add>, %34, %cst_22 [1] : vector<8x8xf32> to vector<8xf32>
      %36 = vector.shape_cast %35 : vector<8xf32> to vector<8x1xf32>
      %37 = arith.addf %32, %36 : vector<8x1xf32>
      %c0_23 = arith.constant 0 : index
      %c0_24 = arith.constant 0 : index
      %38 = vector.load %arg9[%c0_23, %c0_24] : memref<8x1xf32, #tpu.memory_space<vmem>>, vector<8x1xf32>
      tpu.vector_store %arg9[%c0_23, %c0_24], %37 {strides = array<i32>} : memref<8x1xf32, #tpu.memory_space<vmem>>, vector<8x1xf32>,
      %c0_25 = arith.constant 0 : index
      %c0_26 = arith.constant 0 : index
      %39 = vector.load %arg10[%c0_25, %c0_26] : memref<8x1xf32, #tpu.memory_space<vmem>>, vector<8x1xf32>
      %cst_27 = arith.constant 1.000000e+00 : f32
      %cst_28 = arith.constant 0.000000e+00 : f32
      %40 = vector.broadcast %cst_27 : f32 to vector<8x8xf32>
      %41 = vector.broadcast %cst_28 : f32 to vector<8x8xf32>
      %42 = arith.select %18, %40, %41 : vector<8x8xi1>, vector<8x8xf32>
      %cst_29 = arith.constant dense<0.000000e+00> : vector<8xf32>
      %43 = vector.multi_reduction <add>, %42, %cst_29 [1] : vector<8x8xf32> to vector<8xf32>
      %44 = vector.shape_cast %43 : vector<8xf32> to vector<8x1xf32>
      %45 = arith.addf %39, %44 : vector<8x1xf32>
      %c0_30 = arith.constant 0 : index
      %c0_31 = arith.constant 0 : index
      %46 = vector.load %arg10[%c0_30, %c0_31] : memref<8x1xf32, #tpu.memory_space<vmem>>, vector<8x1xf32>
      tpu.vector_store %arg10[%c0_30, %c0_31], %45 {strides = array<i32>} : memref<8x1xf32, #tpu.memory_space<vmem>>, vector<8x1xf32>,
      %c0_32 = arith.constant 0 : index
      %c0_33 = arith.constant 0 : index
      %47 = vector.load %arg8[%c0_32, %c0_33] : memref<8x1xf32, #tpu.memory_space<vmem>>, vector<8x1xf32>
      %cst_34 = arith.constant dense<0xFF800000> : vector<8xf32>
      %48 = vector.multi_reduction <maximumf>, %13, %cst_34 [1] : vector<8x8xf32> to vector<8xf32>
      %49 = vector.shape_cast %48 : vector<8xf32> to vector<8x1xf32>
      %50 = arith.maximumf %47, %49 : vector<8x1xf32>
      %51 = vector.broadcast %50 : vector<8x1xf32> to vector<8x8xf32>
      %52 = arith.subf %13, %51 : vector<8x8xf32>
      %53 = math.exp %52 : vector<8x8xf32>
      %c0_35 = arith.constant 0 : index
      %c0_36 = arith.constant 0 : index
      %54 = vector.load %arg11[%c0_35, %c0_36] : memref<8x1xf32, #tpu.memory_space<vmem>>, vector<8x1xf32>
      %55 = arith.subf %47, %50 : vector<8x1xf32>
      %56 = math.exp %55 : vector<8x1xf32>
      %57 = arith.mulf %54, %56 : vector<8x1xf32>
      %cst_37 = arith.constant 0.000000e+00 : f32
      %58 = vector.broadcast %cst_37 : f32 to vector<8x8xf32>
      %59 = arith.select %31, %53, %58 : vector<8x8xi1>, vector<8x8xf32>
      %cst_38 = arith.constant dense<0.000000e+00> : vector<8xf32>
      %60 = vector.multi_reduction <add>, %59, %cst_38 [1] : vector<8x8xf32> to vector<8xf32>
      %61 = vector.shape_cast %60 : vector<8xf32> to vector<8x1xf32>
      %62 = arith.addf %57, %61 : vector<8x1xf32>
      %c0_39 = arith.constant 0 : index
      %c0_40 = arith.constant 0 : index
      %63 = vector.load %arg11[%c0_39, %c0_40] : memref<8x1xf32, #tpu.memory_space<vmem>>, vector<8x1xf32>
      tpu.vector_store %arg11[%c0_39, %c0_40], %62 {strides = array<i32>} : memref<8x1xf32, #tpu.memory_space<vmem>>, vector<8x1xf32>,
      %c0_41 = arith.constant 0 : index
      %c0_42 = arith.constant 0 : index
      %64 = vector.load %arg8[%c0_41, %c0_42] : memref<8x1xf32, #tpu.memory_space<vmem>>, vector<8x1xf32>
      tpu.vector_store %arg8[%c0_41, %c0_42], %50 {strides = array<i32>} : memref<8x1xf32, #tpu.memory_space<vmem>>, vector<8x1xf32>,
    } else {
    }
    %29 = arith.extui %25 : i1 to i32
    %c0_i32_17 = arith.constant 0 : i32
    %30 = arith.cmpi ne, %29, %c0_i32_17 : i32
    scf.if %30 {
      %31 = tpu.iota {dimensions = array<i32: 0>} : vector<8x8xi32>
      %32 = vector.broadcast %19 : i32 to vector<8x8xi32>
      %33 = arith.addi %31, %32 : vector<8x8xi32>
      %34 = tpu.iota {dimensions = array<i32: 1>} : vector<8x8xi32>
      %35 = vector.broadcast %20 : i32 to vector<8x8xi32>
      %36 = arith.addi %34, %35 : vector<8x8xi32>
      %37 = arith.cmpi eq, %33, %36 : vector<8x8xi32>
      %cst_18 = arith.constant 0.000000e+00 : f32
      %38 = vector.broadcast %cst_18 : f32 to vector<8x8xf32>
      %39 = arith.select %37, %38, %13 : vector<8x8xi1>, vector<8x8xf32>
      %cst_19 = arith.constant dense<true> : vector<8x8xi1>
      %40 = arith.xori %37, %cst_19 : vector<8x8xi1>
      %41 = arith.andi %18, %40 : vector<8x8xi1>
      %cst_20 = arith.constant dense<true> : vector<8x8xi1>
      %42 = arith.xori %18, %cst_20 : vector<8x8xi1>
      %c0_21 = arith.constant 0 : index
      %c0_22 = arith.constant 0 : index
      %43 = vector.load %arg9[%c0_21, %c0_22] : memref<8x1xf32, #tpu.memory_space<vmem>>, vector<8x1xf32>
      %cst_23 = arith.constant 0.000000e+00 : f32
      %44 = vector.broadcast %cst_23 : f32 to vector<8x8xf32>
      %45 = arith.select %41, %39, %44 : vector<8x8xi1>, vector<8x8xf32>
      %cst_24 = arith.constant dense<0.000000e+00> : vector<8xf32>
      %46 = vector.multi_reduction <add>, %45, %cst_24 [1] : vector<8x8xf32> to vector<8xf32>
      %47 = vector.shape_cast %46 : vector<8xf32> to vector<8x1xf32>
      %48 = arith.addf %43, %47 : vector<8x1xf32>
      %c0_25 = arith.constant 0 : index
      %c0_26 = arith.constant 0 : index
      %49 = vector.load %arg9[%c0_25, %c0_26] : memref<8x1xf32, #tpu.memory_space<vmem>>, vector<8x1xf32>
      tpu.vector_store %arg9[%c0_25, %c0_26], %48 {strides = array<i32>} : memref<8x1xf32, #tpu.memory_space<vmem>>, vector<8x1xf32>,
      %c0_27 = arith.constant 0 : index
      %c0_28 = arith.constant 0 : index
      %50 = vector.load %arg10[%c0_27, %c0_28] : memref<8x1xf32, #tpu.memory_space<vmem>>, vector<8x1xf32>
      %cst_29 = arith.constant 1.000000e+00 : f32
      %cst_30 = arith.constant 0.000000e+00 : f32
      %51 = vector.broadcast %cst_29 : f32 to vector<8x8xf32>
      %52 = vector.broadcast %cst_30 : f32 to vector<8x8xf32>
      %53 = arith.select %41, %51, %52 : vector<8x8xi1>, vector<8x8xf32>
      %cst_31 = arith.constant dense<0.000000e+00> : vector<8xf32>
      %54 = vector.multi_reduction <add>, %53, %cst_31 [1] : vector<8x8xf32> to vector<8xf32>
      %55 = vector.shape_cast %54 : vector<8xf32> to vector<8x1xf32>
      %56 = arith.addf %50, %55 : vector<8x1xf32>
      %c0_32 = arith.constant 0 : index
      %c0_33 = arith.constant 0 : index
      %57 = vector.load %arg10[%c0_32, %c0_33] : memref<8x1xf32, #tpu.memory_space<vmem>>, vector<8x1xf32>
      tpu.vector_store %arg10[%c0_32, %c0_33], %56 {strides = array<i32>} : memref<8x1xf32, #tpu.memory_space<vmem>>, vector<8x1xf32>,
      %c0_34 = arith.constant 0 : index
      %c0_35 = arith.constant 0 : index
      %58 = vector.load %arg8[%c0_34, %c0_35] : memref<8x1xf32, #tpu.memory_space<vmem>>, vector<8x1xf32>
      %cst_36 = arith.constant dense<0xFF800000> : vector<8xf32>
      %59 = vector.multi_reduction <maximumf>, %39, %cst_36 [1] : vector<8x8xf32> to vector<8xf32>
      %60 = vector.shape_cast %59 : vector<8xf32> to vector<8x1xf32>
      %61 = arith.maximumf %58, %60 : vector<8x1xf32>
      %62 = vector.broadcast %61 : vector<8x1xf32> to vector<8x8xf32>
      %63 = arith.subf %39, %62 : vector<8x8xf32>
      %64 = math.exp %63 : vector<8x8xf32>
      %c0_37 = arith.constant 0 : index
      %c0_38 = arith.constant 0 : index
      %65 = vector.load %arg11[%c0_37, %c0_38] : memref<8x1xf32, #tpu.memory_space<vmem>>, vector<8x1xf32>
      %66 = arith.subf %58, %61 : vector<8x1xf32>
      %67 = math.exp %66 : vector<8x1xf32>
      %68 = arith.mulf %65, %67 : vector<8x1xf32>
      %cst_39 = arith.constant 0.000000e+00 : f32
      %69 = vector.broadcast %cst_39 : f32 to vector<8x8xf32>
      %70 = arith.select %42, %64, %69 : vector<8x8xi1>, vector<8x8xf32>
      %cst_40 = arith.constant dense<0.000000e+00> : vector<8xf32>
      %71 = vector.multi_reduction <add>, %70, %cst_40 [1] : vector<8x8xf32> to vector<8xf32>
      %72 = vector.shape_cast %71 : vector<8xf32> to vector<8x1xf32>
      %73 = arith.addf %68, %72 : vector<8x1xf32>
      %c0_41 = arith.constant 0 : index
      %c0_42 = arith.constant 0 : index
      %74 = vector.load %arg11[%c0_41, %c0_42] : memref<8x1xf32, #tpu.memory_space<vmem>>, vector<8x1xf32>
      tpu.vector_store %arg11[%c0_41, %c0_42], %73 {strides = array<i32>} : memref<8x1xf32, #tpu.memory_space<vmem>>, vector<8x1xf32>,
      %c0_43 = arith.constant 0 : index
      %c0_44 = arith.constant 0 : index
      %75 = vector.load %arg8[%c0_43, %c0_44] : memref<8x1xf32, #tpu.memory_space<vmem>>, vector<8x1xf32>
      tpu.vector_store %arg8[%c0_43, %c0_44], %61 {strides = array<i32>} : memref<8x1xf32, #tpu.memory_space<vmem>>, vector<8x1xf32>,
    } else {
    }
    return
  }
  func.func @transform_0(%arg0: i32, %arg1: i32) -> (i32, i32) {
    %c0_i32 = arith.constant 0 : i32
    %c0_i32_0 = arith.constant 0 : i32
    return %arg0, %c0_i32 : i32, i32
  }
  func.func @transform_1(%arg0: i32, %arg1: i32) -> (i32, i32) {
    %c0_i32 = arith.constant 0 : i32
    %c0_i32_0 = arith.constant 0 : i32
    return %arg1, %c0_i32 : i32, i32
  }
  func.func @transform_2(%arg0: i32, %arg1: i32) -> (i32, i32) {
    %c0_i32 = arith.constant 0 : i32
    %c0_i32_0 = arith.constant 0 : i32
    return %arg0, %c0_i32 : i32, i32
  }
  func.func @transform_3(%arg0: i32, %arg1: i32) -> (i32, i32) {
    %c0_i32 = arith.constant 0 : i32
    %c0_i32_0 = arith.constant 0 : i32
    return %c0_i32, %arg1 : i32, i32
  }
  func.func @transform_4(%arg0: i32, %arg1: i32) -> (i32, i32) {
    %c0_i32 = arith.constant 0 : i32
    %c0_i32_0 = arith.constant 0 : i32
    return %arg0, %c0_i32 : i32, i32
  }
  func.func @transform_5(%arg0: i32, %arg1: i32) -> (i32, i32) {
    %c0_i32 = arith.constant 0 : i32
    %c0_i32_0 = arith.constant 0 : i32
    return %c0_i32, %arg1 : i32, i32
  }
  func.func @transform_6(%arg0: i32, %arg1: i32) -> (i32, i32) {
    %c0_i32 = arith.constant 0 : i32
    %c0_i32_0 = arith.constant 0 : i32
    return %arg0, %c0_i32 : i32, i32
  }
  func.func @transform_7(%arg0: i32, %arg1: i32) -> (i32, i32) {
    %c0_i32 = arith.constant 0 : i32
    %c0_i32_0 = arith.constant 0 : i32
    return %arg0, %c0_i32 : i32, i32
  }
  func.func @transform_8(%arg0: i32, %arg1: i32) -> (i32, i32) {
    %c0_i32 = arith.constant 0 : i32
    %c0_i32_0 = arith.constant 0 : i32
    return %arg0, %c0_i32 : i32, i32
  }
  func.func @transform_9(%arg0: i32, %arg1: i32) -> (i32, i32) {
    %c0_i32 = arith.constant 0 : i32
    %c0_i32_0 = arith.constant 0 : i32
    return %arg0, %c0_i32 : i32, i32
  }
}

</mosaic_0001>

<llo_original>
// kernel: tpu_custom_call.1
$region0: #{tpu_custom_call.1}
  #allocation0 [shape = 'u32[]', space=smem, size = 0x4, offset = 0x4, fixed_abs, tag = 'smem constant byte address 0x4 - core index']
  #allocation1 [shape = 'u32[144,128]{1,0:T(1,128)}', space=vmem, size = 0x12000, scoped, tag = 'internal scratch']
  %s0 = inlined_call_operand.vmem [shape: f32[8,32], index: 0, kind: input, shape index: {}]
  %s1 = inlined_call_operand.vmem [shape: f32[8,32], index: 1, kind: input, shape index: {}]
  %s2 = inlined_call_operand.vmem [shape: f32[8,1], index: 2, kind: input, shape index: {}]
  %s3 = inlined_call_operand.vmem [shape: f32[1,8], index: 3, kind: input, shape index: {}]
  %s4 = inlined_call_operand.vmem [shape: s32[8,1], index: 4, kind: input, shape index: {}]
  %s5 = inlined_call_operand.vmem [shape: s32[1,8], index: 5, kind: input, shape index: {}]
  %s6 = inlined_call_operand.vmem [shape: f32[8,1], index: 6, kind: output, shape index: {0}]
  %s7 = inlined_call_operand.vmem [shape: f32[8,1], index: 7, kind: output, shape index: {1}]
  %s8 = inlined_call_operand.vmem [shape: f32[8,1], index: 8, kind: output, shape index: {2}]
  %s9 = inlined_call_operand.vmem [shape: f32[8,1], index: 9, kind: output, shape index: {3}]
  %10 = xla_tuple %s6, %s7, %s8, %s9
  %s11 = sld [smem:[#allocation0]]
  $region70: #{tpu_custom_call.1} parent=0
    _
  %s13 = ssub.s32 1, %s11
  %s14 = scalar_select 0, %s13, %s11
  // Predicated region
  $region2: #{tpu_custom_call.1} parent=0 // pred_check
    _
  $region3: #{tpu_custom_call.1} parent=0 // pred_check_branch
    %16 = sbr.rel (0) target = $region5
  $region4: #{tpu_custom_call.1} parent=0 // pred_region
    _
  $region5: #{tpu_custom_call.1} parent=0 // pred_fallthru
    _
  // Predicated region
  $region6: #{tpu_custom_call.1} parent=0 // pred_check
    _
  $region7: #{tpu_custom_call.1} parent=0 // pred_check_branch
    %18 = sbr.rel (0) target = $region9
  $region8: #{tpu_custom_call.1} parent=0 // pred_region
    _
  $region9: #{tpu_custom_call.1} parent=0 // pred_fallthru
    _
  // Predicated region
  $region10: #{tpu_custom_call.1} parent=0 // pred_check
    _
  $region11: #{tpu_custom_call.1} parent=0 // pred_check_branch
    %20 = sbr.rel (0) target = $region13
  $region12: #{tpu_custom_call.1} parent=0 // pred_region
    _
  $region13: #{tpu_custom_call.1} parent=0 // pred_fallthru
    _
  // Predicated region
  $region14: #{tpu_custom_call.1} parent=0 // pred_check
    _
  $region15: #{tpu_custom_call.1} parent=0 // pred_check_branch
    %22 = sbr.rel (0) target = $region17
  $region16: #{tpu_custom_call.1} parent=0 // pred_region
    _
  $region17: #{tpu_custom_call.1} parent=0 // pred_fallthru
    _
  // Predicated region
  $region18: #{tpu_custom_call.1} parent=0 // pred_check
    _
  $region19: #{tpu_custom_call.1} parent=0 // pred_check_branch
    %24 = sbr.rel (0) target = $region21
  $region20: #{tpu_custom_call.1} parent=0 // pred_region
    _
  $region21: #{tpu_custom_call.1} parent=0 // pred_fallthru
    _
  // Predicated region
  $region22: #{tpu_custom_call.1} parent=0 // pred_check
    _
  $region23: #{tpu_custom_call.1} parent=0 // pred_check_branch
    %26 = sbr.rel (0) target = $region25
  $region24: #{tpu_custom_call.1} parent=0 // pred_region
    _
  $region25: #{tpu_custom_call.1} parent=0 // pred_fallthru
    _
  %p27 = scmp.eq.s32.totalorder 0, 0
  // Predicated region
  $region26: #{tpu_custom_call.1} parent=0 // pred_check
    %p28 = pneg %p27
  $region27: #{tpu_custom_call.1} parent=0 // pred_check_branch
    %30 = sbr.rel (%p28) target = $region29
  $region28: #{tpu_custom_call.1} parent=0 // pred_region
    %vm31 = vcmask 7168
    %32 = vst.msk [vmem:[%s6] sm:$0xff] %vm31, -1e+30
    %33 = vst.msk [vmem:[%s7] sm:$0xff] %vm31, 0.0
    %34 = vst.msk [vmem:[%s8] sm:$0xff] %vm31, 0.0
    %35 = vst.msk [vmem:[%s9] sm:$0xff] %vm31, 0.0
  $region29: #{tpu_custom_call.1} parent=0 // pred_fallthru
    _
  %v36 = vld [vmem:[%s0] sm:$0xff]
  %v37 = vld [vmem:[%s1] sm:$0xff]
  %vm38 = vcmask 261120
  %v40 = vsel %vm38, %v36, 0
  %v43 = vsel %vm38, %v37, 0
  %45 = vmatprep.subr.mxu0 0.0
  %46 = vmatpush1.xpose.msra.mxu0 0.0
  %47 = vmatprep.subr.mxu0 0.0
  %48 = vmatpush1.xpose.msra.mxu0 0.0
  %49 = vmatprep.subr.mxu0 0.0
  %50 = vmatpush1.xpose.msra.mxu0 0.0
  %51 = vmatprep.subr.mxu0 0.0
  %52 = vmatpush1.xpose.msra.mxu0 0.0
  %53 = vmatprep.subr.mxu0 0.0
  %54 = vmatpush1.xpose.msra.mxu0 0.0
  %55 = vmatprep.subr.mxu0 0.0
  %56 = vmatpush1.xpose.msra.mxu0 0.0
  %57 = vmatprep.subr.mxu0 0.0
  %58 = vmatpush1.xpose.msra.mxu0 0.0
  %59 = vmatprep.subr.mxu0 0.0
  %60 = vmatpush1.xpose.msra.mxu0 0.0
  %61 = vmatprep.subr.mxu0 0.0
  %62 = vmatpush1.xpose.msra.mxu0 0.0
  %63 = vmatprep.subr.mxu0 0.0
  %64 = vmatpush1.xpose.msra.mxu0 0.0
  %65 = vmatprep.subr.mxu0 0.0
  %66 = vmatpush1.xpose.msra.mxu0 0.0
  %67 = vmatprep.subr.mxu0 0.0
  %68 = vmatpush1.xpose.msra.mxu0 0.0
  %69 = vmatprep.subr.mxu0 0.0
  %70 = vmatpush1.xpose.msra.mxu0 0.0
  %71 = vmatprep.subr.mxu0 0.0
  %72 = vmatpush1.xpose.msra.mxu0 0.0
  %73 = vmatprep.subr.mxu0 0.0
  %74 = vmatpush1.xpose.msra.mxu0 0.0
  %75 = vmatprep.subr.mxu0 0.0
  %76 = vmatpush1.xpose.msra.mxu0 %v43
  %77 = vmatprep.subr.mxu0 0.0
  %78 = vmatpush2.xpose.msra.mxu0 0.0
  %79 = vmatprep.subr.mxu0 0.0
  %80 = vmatpush2.xpose.msra.mxu0 0.0
  %81 = vmatprep.subr.mxu0 0.0
  %82 = vmatpush2.xpose.msra.mxu0 0.0
  %83 = vmatprep.subr.mxu0 0.0
  %84 = vmatpush2.xpose.msra.mxu0 0.0
  %85 = vmatprep.subr.mxu0 0.0
  %86 = vmatpush2.xpose.msra.mxu0 0.0
  %87 = vmatprep.subr.mxu0 0.0
  %88 = vmatpush2.xpose.msra.mxu0 0.0
  %89 = vmatprep.subr.mxu0 0.0
  %90 = vmatpush2.xpose.msra.mxu0 0.0
  %91 = vmatprep.subr.mxu0 0.0
  %92 = vmatpush2.xpose.msra.mxu0 0.0
  %93 = vmatprep.subr.mxu0 0.0
  %94 = vmatpush2.xpose.msra.mxu0 0.0
  %95 = vmatprep.subr.mxu0 0.0
  %96 = vmatpush2.xpose.msra.mxu0 0.0
  %97 = vmatprep.subr.mxu0 0.0
  %98 = vmatpush2.xpose.msra.mxu0 0.0
  %99 = vmatprep.subr.mxu0 0.0
  %100 = vmatpush2.xpose.msra.mxu0 0.0
  %101 = vmatprep.subr.mxu0 0.0
  %102 = vmatpush2.xpose.msra.mxu0 0.0
  %103 = vmatprep.subr.mxu0 0.0
  %104 = vmatpush2.xpose.msra.mxu0 0.0
  %105 = vmatprep.subr.mxu0 0.0
  %106 = vmatpush2.xpose.msra.mxu0 0.0
  %107 = vmatprep.subr.mxu0 0.0
  %108 = vmatpush2.xpose.msra.mxu0 0.0
  %109 = vmatprep.mubr.f32.mxu0 0.0
  %110 = vmatmul.mubr.f32.gmra.mxu0 %v40
  %v111 = vpop.f32.mrf.mxu0
  %v112 = vadd.f32 0.0, %v111
  %v113 = vpop.f32.mrf.mxu0
  %114 = vdwg.mxu0
  %v115 = vld [vmem:[%s2] sm:$0xff]
  %117 = vset.pattern.permute.xlu0 0
  %118 = vperm.xlu0 %117, %v115
  %v119 = vpop.permute.xlu0 %118
  %v121 = vmul.f32 %v112, %v119
  %v122 = vld [vmem:[%s3] sm:$0x1]
  %v124 = vlaneseq
  %v125 = vshrl.u32 %v124, 7
  %v126 = vsub.s32 0, %v125
  %v127 = vrot.slane %v122, %v126
  %v129 = vmul.f32 %v121, %v127
  %v130 = vadd.f32 %v129, 1.0
  %v131 = vld [vmem:[%s4] sm:$0xff]
  %v132 = vld [vmem:[%s5] sm:$0x1]
  %133 = vset.pattern.permute.xlu0 0
  %134 = vperm.xlu0 %133, %v131
  %v135 = vpop.permute.xlu0 %134
  %v136 = vlaneseq
  %v137 = vshrl.u32 %v136, 7
  %v138 = vsub.s32 0, %v137
  %v139 = vrot.slane %v132, %v138
  %vm140 = vcmp.eq.s32.totalorder %v135, %v139
  %s141 = smul.u32 0, 8
  %s142 = smul.u32 0, 8
  %s143 = sadd.s32 %s142, 8
  %p144 = scmp.lt.s32.totalorder %s141, %s143
  %s145 = sadd.s32 %s141, 8
  %p146 = scmp.lt.s32.totalorder %s142, %s145
  %p147 = pnand %p144, %p146
  %p148 = pneg %p147
  // Predicated region
  $region30: #{tpu_custom_call.1} parent=0 // pred_check
    _
  $region31: #{tpu_custom_call.1} parent=0 // pred_check_branch
    %150 = sbr.rel (%p147) target = $region33
  $region32: #{tpu_custom_call.1} parent=0 // pred_region
    %v151 = vlaneseq
    %v152 = vshrl.u32 %v151, 7
    %v153 = vstv %s141
    %v154 = vadd.s32 %v152, %v153
    %v155 = vlaneseq
    %v156 = vand.u32 %v155, 127
    %v157 = vstv %s142
    %v158 = vadd.s32 %v156, %v157
    %vm159 = vcmp.eq.s32.totalorder %v154, %v158
    %v160 = vsel %vm159, 0.0, %v130
    %vm161 = vmxor %vm159, 1
    %vm162 = vmand %vm140, %vm161
    %vm163 = vmxor %vm140, 1
    %v164 = vld [vmem:[%s7] sm:$0xff]
    %v165 = vsel %vm162, %v160, 0.0
    %vm166 = vcmask 64512
    %v167 = vsel %vm166, %v165, 0.0
    %168 = vadd.xlane.f32.xlu0 %v167
    %v169 = vpop.xlane.xlu0 %168
    %v170 = vadd.f32 %v164, %v169
    %vm171 = vcmask 7168
    %172 = vst.msk [vmem:[%s7] sm:$0xff] %vm171, %v170
    %v173 = vld [vmem:[%s8] sm:$0xff]
    %v174 = vsel %vm162, 1.0, 0.0
    %v175 = vsel %vm166, %v174, 0.0
    %176 = vadd.xlane.f32.xlu0 %v175
    %v177 = vpop.xlane.xlu0 %176
    %v178 = vadd.f32 %v173, %v177
    %179 = vst.msk [vmem:[%s8] sm:$0xff] %vm171, %v178
    %v180 = vld [vmem:[%s6] sm:$0xff]
    %v181 = vsel %vm166, %v160, -inf
    %182 = vmax.xlane.f32.xlu0 %v181
    %v183 = vpop.xlane.xlu0 %182
    %v184 = vmax.f32 %v180, %v183
    %186 = vset.pattern.permute.xlu0 0
    %187 = vperm.xlu0 %186, %v184
    %v188 = vpop.permute.xlu0 %187
    %v190 = vsub.f32 %v160, %v188
    %v191 = vmul.f32 %v190, 1.442695
    %v192 = vpow.pop %v191
    %v193 = vld [vmem:[%s9] sm:$0xff]
    %v194 = vsub.f32 %v180, %v184
    %v195 = vmul.f32 %v194, 1.442695
    %v196 = vpow.pop %v195
    %v197 = vmul.f32 %v193, %v196
    %v198 = vsel %vm163, %v192, 0.0
    %v199 = vsel %vm166, %v198, 0.0
    %200 = vadd.xlane.f32.xlu0 %v199
    %v201 = vpop.xlane.xlu0 %200
    %v202 = vadd.f32 %v197, %v201
    %203 = vst.msk [vmem:[%s9] sm:$0xff] %vm171, %v202
    %204 = vst.msk [vmem:[%s6] sm:$0xff] %vm171, %v184
  $region33: #{tpu_custom_call.1} parent=0 // pred_fallthru
    _
  // Predicated region
  $region34: #{tpu_custom_call.1} parent=0 // pred_check
    %p205 = pneg %p147
  $region35: #{tpu_custom_call.1} parent=0 // pred_check_branch
    %207 = sbr.rel (%p205) target = $region37
  $region36: #{tpu_custom_call.1} parent=0 // pred_region
    %vm208 = vmxor %vm140, 1
    %v209 = vld [vmem:[%s7] sm:$0xff]
    %v210 = vsel %vm140, %v130, 0.0
    %vm211 = vcmask 64512
    %v212 = vsel %vm211, %v210, 0.0
    %213 = vadd.xlane.f32.xlu0 %v212
    %v214 = vpop.xlane.xlu0 %213
    %v215 = vadd.f32 %v209, %v214
    %vm216 = vcmask 7168
    %217 = vst.msk [vmem:[%s7] sm:$0xff] %vm216, %v215
    %v218 = vld [vmem:[%s8] sm:$0xff]
    %v219 = vsel %vm140, 1.0, 0.0
    %v220 = vsel %vm211, %v219, 0.0
    %221 = vadd.xlane.f32.xlu0 %v220
    %v222 = vpop.xlane.xlu0 %221
    %v223 = vadd.f32 %v218, %v222
    %224 = vst.msk [vmem:[%s8] sm:$0xff] %vm216, %v223
    %v225 = vld [vmem:[%s6] sm:$0xff]
    %v226 = vsel %vm211, %v130, -inf
    %227 = vmax.xlane.f32.xlu0 %v226
    %v228 = vpop.xlane.xlu0 %227
    %v229 = vmax.f32 %v225, %v228
    %231 = vset.pattern.permute.xlu0 0
    %232 = vperm.xlu0 %231, %v229
    %v233 = vpop.permute.xlu0 %232
    %v235 = vsub.f32 %v130, %v233
    %v236 = vmul.f32 %v235, 1.442695
    %v237 = vpow.pop %v236
    %v238 = vld [vmem:[%s9] sm:$0xff]
    %v239 = vsub.f32 %v225, %v229
    %v240 = vmul.f32 %v239, 1.442695
    %v241 = vpow.pop %v240
    %v242 = vmul.f32 %v238, %v241
    %v243 = vsel %vm208, %v237, 0.0
    %v244 = vsel %vm211, %v243, 0.0
    %245 = vadd.xlane.f32.xlu0 %v244
    %v246 = vpop.xlane.xlu0 %245
    %v247 = vadd.f32 %v242, %v246
    %248 = vst.msk [vmem:[%s9] sm:$0xff] %vm216, %v247
    %249 = vst.msk [vmem:[%s6] sm:$0xff] %vm216, %v229
  $region37: #{tpu_custom_call.1} parent=0 // pred_fallthru
    _
  // Predicated region
  $region38: #{tpu_custom_call.1} parent=0 // pred_check
    _
  $region39: #{tpu_custom_call.1} parent=0 // pred_check_branch
    %251 = sbr.rel (0) target = $region41
  $region40: #{tpu_custom_call.1} parent=0 // pred_region
    _
  $region41: #{tpu_custom_call.1} parent=0 // pred_fallthru
    _
  // Predicated region
  $region42: #{tpu_custom_call.1} parent=0 // pred_check
    _
  $region43: #{tpu_custom_call.1} parent=0 // pred_check_branch
    %253 = sbr.rel (0) target = $region45
  $region44: #{tpu_custom_call.1} parent=0 // pred_region
    _
  $region45: #{tpu_custom_call.1} parent=0 // pred_fallthru
    _
  // Predicated region
  $region46: #{tpu_custom_call.1} parent=0 // pred_check
    _
  $region47: #{tpu_custom_call.1} parent=0 // pred_check_branch
    %255 = sbr.rel (0) target = $region49
  $region48: #{tpu_custom_call.1} parent=0 // pred_region
    _
  $region49: #{tpu_custom_call.1} parent=0 // pred_fallthru
    _
  // Predicated region
  $region50: #{tpu_custom_call.1} parent=0 // pred_check
    _
  $region51: #{tpu_custom_call.1} parent=0 // pred_check_branch
    %257 = sbr.rel (0) target = $region53
  $region52: #{tpu_custom_call.1} parent=0 // pred_region
    _
  $region53: #{tpu_custom_call.1} parent=0 // pred_fallthru
    _
  // Predicated region
  $region54: #{tpu_custom_call.1} parent=0 // pred_check
    _
  $region55: #{tpu_custom_call.1} parent=0 // pred_check_branch
    %259 = sbr.rel (0) target = $region57
  $region56: #{tpu_custom_call.1} parent=0 // pred_region
    _
  $region57: #{tpu_custom_call.1} parent=0 // pred_fallthru
    _
  // Predicated region
  $region58: #{tpu_custom_call.1} parent=0 // pred_check
    _
  $region59: #{tpu_custom_call.1} parent=0 // pred_check_branch
    %261 = sbr.rel (0) target = $region61
  $region60: #{tpu_custom_call.1} parent=0 // pred_region
    _
  $region61: #{tpu_custom_call.1} parent=0 // pred_fallthru
    _
  // Predicated region
  $region62: #{tpu_custom_call.1} parent=0 // pred_check
    _
  $region63: #{tpu_custom_call.1} parent=0 // pred_check_branch
    %263 = sbr.rel (0) target = $region65
  $region64: #{tpu_custom_call.1} parent=0 // pred_region
    _
  $region65: #{tpu_custom_call.1} parent=0 // pred_fallthru
    _
  // Predicated region
  $region66: #{tpu_custom_call.1} parent=0 // pred_check
    _
  $region67: #{tpu_custom_call.1} parent=0 // pred_check_branch
    %265 = sbr.rel (0) target = $region69
  $region68: #{tpu_custom_call.1} parent=0 // pred_region
    _
  $region69: #{tpu_custom_call.1} parent=0 // pred_fallthru
    _

</llo_original>
